<compile_context>
chip_gen: v6e
topology: v6e:2x2x1
jax: 0.10.0
libtpu: 0.0.40
codegen_flags: <defaults>
</compile_context>

<pallas_src>
import functools

import jax
import jax.numpy as jnp
from jax.experimental import pallas as pl
from jax.experimental.pallas import tpu as pltpu


# Don't split the copy below ~1 MiB per chunk; above that, up to 8 concurrent
# chunk DMAs (HBM -> HBM, contiguous) to spread work across DMA engines.
_MIN_CHUNK_BYTES = 1 * 1024 * 1024
_CHUNK_CANDIDATES = (8, 4, 2)


def _hbm_copy_kernel(x_hbm, o_hbm, sem, *, n_chunks):
    # Direct HBM -> HBM copy, no VMEM staging.  Start every chunk DMA first
    # (they proceed concurrently on the DMA engines), then wait on all.
    copies = [
        pltpu.make_async_copy(x_hbm.at[i], o_hbm.at[i], sem.at[i])
        for i in range(n_chunks)
    ]
    for c in copies:
        c.start()
    for c in copies:
        c.wait()


def _choose_n_chunks(total_elems: int, itemsize: int) -> int:
    nbytes = total_elems * itemsize
    for n in _CHUNK_CANDIDATES:
        if total_elems % n == 0 and nbytes // n >= _MIN_CHUNK_BYTES:
            return n
    return 1


def _pallas_copy(x: jax.Array) -> jax.Array:
    total = int(x.size)
    itemsize = jnp.dtype(x.dtype).itemsize
    n_chunks = _choose_n_chunks(total, itemsize)
    chunk = total // n_chunks
    x2d = x.reshape(n_chunks, chunk)
    nbytes = total * itemsize

    y2d = pl.pallas_call(
        functools.partial(_hbm_copy_kernel, n_chunks=n_chunks),
        out_shape=jax.ShapeDtypeStruct((n_chunks, chunk), x.dtype),
        in_specs=[pl.BlockSpec(memory_space=pl.ANY)],
        out_specs=pl.BlockSpec(memory_space=pl.ANY),
        scratch_shapes=[pltpu.SemaphoreType.DMA((n_chunks,))],
        compiler_params=pltpu.CompilerParams(has_side_effects=True),
        cost_estimate=pl.CostEstimate(
            flops=0, transcendentals=0, bytes_accessed=2 * nbytes
        ),
    )(x2d)
    return y2d.reshape(x.shape)


def pallas_diffusion_model_identity(x: jax.Array, *args, **kwargs) -> jax.Array:
    """Stand-in wrapped `diffusion_model`: identity on its tensor input.

    Extra positional / keyword conditioning args (timesteps, context, ...) are
    accepted and ignored, mirroring a model whose output equals its input.
    """
    del args, kwargs
    if int(x.size) == 0:
        return x
    return _pallas_copy(x)


class IdentityWrapper:
    """JAX/Pallas port of sgm IdentityWrapper: forwards everything to the model."""

    def __init__(self, diffusion_model, compile_model: bool = False):
        # torch.compile analogue: jax.jit when requested, otherwise pass-through.
        compile_fn = jax.jit if compile_model else (lambda f: f)
        self.diffusion_model = compile_fn(diffusion_model)

    def __call__(self, *args, **kwargs):
        return self.diffusion_model(*args, **kwargs)

    # Match nn.Module's .forward naming too.
    forward = __call__


if __name__ == "__main__":
    key = jax.random.PRNGKey(0)
    kx, kt, kc = jax.random.split(key, 3)

    # Small SDXL-ish latent shapes: batch=2, channels=4, spatial=16.
    x = jax.random.normal(kx, (2, 4, 16, 16), dtype=jnp.float32)          # NCHW
    timesteps = jax.random.uniform(kt, (2,), dtype=jnp.float32)           # ignored cond
    context = jax.random.normal(kc, (2, 8, 32), dtype=jnp.float32)        # ignored cond

    wrapper = IdentityWrapper(pallas_diffusion_model_identity, compile_model=True)
    out = wrapper(x, timesteps, context=context)
    out = jax.block_until_ready(out)

    assert out.shape == x.shape and out.dtype == x.dtype
    assert bool(jnp.array_equal(out, x))

    # Ragged (non-128-divisible, sub-32-bit dtype) shape: same DMA path now.
    x_ragged = jax.random.normal(kx, (2, 3, 7, 5), dtype=jnp.bfloat16)
    out_ragged = jax.block_until_ready(pallas_diffusion_model_identity(x_ragged))
    assert out_ragged.shape == x_ragged.shape and out_ragged.dtype == x_ragged.dtype
    assert bool(jnp.array_equal(out_ragged, x_ragged))

    # Larger, chunked path (2 MiB f32 -> multiple concurrent chunk DMAs).
    x_big = jax.random.normal(kx, (8, 4, 128, 128), dtype=jnp.float32)
    out_big = jax.block_until_ready(pallas_diffusion_model_identity(x_big))
    assert bool(jnp.array_equal(out_big, x_big))

    print("KERNEL_OK")
</pallas_src>

<mosaic_0001>
module attributes {stable_mosaic.version = 11 : i64} {
  func.func @_hbm_copy_kernel(%arg0: memref<1x2048xf32, #tpu.memory_space<any>>, %arg1: memref<1x2048xf32, #tpu.memory_space<any>>, %arg2: memref<1x!tpu.dma_semaphore, #tpu.memory_space<semaphore_mem>>) attributes {dimension_semantics = [], scalar_prefetch = 0 : i64, scratch_operands = 1 : i64, tpu.core_type = #tpu.core_type<tc>} {
    %c0_i32 = arith.constant 0 : i32
    %c0_i32_0 = arith.constant 0 : i32
    %c0_i32_1 = arith.constant 0 : i32
    %c0_i32_2 = arith.constant 0 : i32
    %0 = tpu.memref_slice %arg0[%c0_i32, %c0_i32_2] : memref<1x2048xf32, #tpu.memory_space<any>> -> memref<1x2048xf32, #tpu.memory_space<any>>
    %1 = tpu.memref_squeeze %0 : memref<1x2048xf32, #tpu.memory_space<any>> -> memref<2048xf32, #tpu.memory_space<any>>
    %c0_i32_3 = arith.constant 0 : i32
    %2 = tpu.memref_slice %arg1[%c0_i32_0, %c0_i32_3] : memref<1x2048xf32, #tpu.memory_space<any>> -> memref<1x2048xf32, #tpu.memory_space<any>>
    %3 = tpu.memref_squeeze %2 : memref<1x2048xf32, #tpu.memory_space<any>> -> memref<2048xf32, #tpu.memory_space<any>>
    %4 = tpu.memref_slice %arg2[%c0_i32_1] : memref<1x!tpu.dma_semaphore, #tpu.memory_space<semaphore_mem>> -> memref<1x!tpu.dma_semaphore, #tpu.memory_space<semaphore_mem>>
    %5 = tpu.memref_squeeze %4 : memref<1x!tpu.dma_semaphore, #tpu.memory_space<semaphore_mem>> -> memref<!tpu.dma_semaphore, #tpu.memory_space<semaphore_mem>>
    tpu.enqueue_dma source(%1 : memref<2048xf32, #tpu.memory_space<any>>) target(%3 : memref<2048xf32, #tpu.memory_space<any>>) target_semaphore(%5 : memref<!tpu.dma_semaphore, #tpu.memory_space<semaphore_mem>>)
    %c0_i32_4 = arith.constant 0 : i32
    %c0_i32_5 = arith.constant 0 : i32
    %c0_i32_6 = arith.constant 0 : i32
    %c0_i32_7 = arith.constant 0 : i32
    %6 = tpu.memref_slice %arg0[%c0_i32_4, %c0_i32_7] : memref<1x2048xf32, #tpu.memory_space<any>> -> memref<1x2048xf32, #tpu.memory_space<any>>
    %7 = tpu.memref_squeeze %6 : memref<1x2048xf32, #tpu.memory_space<any>> -> memref<2048xf32, #tpu.memory_space<any>>
    %c0_i32_8 = arith.constant 0 : i32
    %8 = tpu.memref_slice %arg1[%c0_i32_5, %c0_i32_8] : memref<1x2048xf32, #tpu.memory_space<any>> -> memref<1x2048xf32, #tpu.memory_space<any>>
    %9 = tpu.memref_squeeze %8 : memref<1x2048xf32, #tpu.memory_space<any>> -> memref<2048xf32, #tpu.memory_space<any>>
    %10 = tpu.memref_slice %arg2[%c0_i32_6] : memref<1x!tpu.dma_semaphore, #tpu.memory_space<semaphore_mem>> -> memref<1x!tpu.dma_semaphore, #tpu.memory_space<semaphore_mem>>
    %11 = tpu.memref_squeeze %10 : memref<1x!tpu.dma_semaphore, #tpu.memory_space<semaphore_mem>> -> memref<!tpu.dma_semaphore, #tpu.memory_space<semaphore_mem>>
    tpu.wait_dma2 semaphore(%11 : memref<!tpu.dma_semaphore, #tpu.memory_space<semaphore_mem>>) src(%7 : memref<2048xf32, #tpu.memory_space<any>>) dst(%9 : memref<2048xf32, #tpu.memory_space<any>>)
    return
  }
}

</mosaic_0001>

<llo_original>
// kernel: pallas_diffusion_model_identity.1
$region0: #{pallas_diffusion_model_identity.1}
  #allocation0 [shape = 'u32[]', space=smem, size = 0x4, offset = 0x4, fixed_abs, tag = 'smem constant byte address 0x4 - core index']
  #allocation1 [shape = 'u32[144,128]{1,0:T(1,128)}', space=vmem, size = 0x12000, scoped, tag = 'internal scratch']
  #allocation2 [shape = 's32[1]{0}', space=sflag, size = 0x4, scoped, tag = 'scratch operand']
  #allocation3 [shape = 's32[]', space=sflag, size = 0x4, offset = 0, fixed_abs, tag = 'sflag constant byte address 0x0 - dummy sync flag']
  %s0 = inlined_call_operand.vmem [shape: f32[1,2048], index: 0, kind: input, shape index: {}]
  %s1 = inlined_call_operand.vmem [shape: f32[1,2048], index: 1, kind: output, shape index: {}]
  %s2 = sld [smem:[#allocation0]]
  $region36: #{pallas_diffusion_model_identity.1} parent=0
    _
  %s4 = ssub.s32 1, %s2
  %s5 = scalar_select 0, %s4, %s2
  %p7 = scmp.lt.u32.totalorder 16, 8
  %p8 = pneg %p7
  // Predicated region
  $region2: #{pallas_diffusion_model_identity.1} parent=0 // pred_check
    _
  $region3: #{pallas_diffusion_model_identity.1} parent=0 // pred_check_branch
    %10 = sbr.rel (%p7) target = $region5
  $region4: #{pallas_diffusion_model_identity.1} parent=0 // pred_region
    %s26 = sand.u32 16, 7
    %p27 = scmp.eq.s32.totalorder %s26, 0
    // Predicated region
    $region17: #{pallas_diffusion_model_identity.1} parent=4 // pred_check
      %p28 = pneg %p27
    $region18: #{pallas_diffusion_model_identity.1} parent=4 // pred_check_branch
      %30 = sbr.rel (%p28) target = $region20
    $region19: #{pallas_diffusion_model_identity.1} parent=4 // pred_region
      loop: start=0, step=1, limit=1
      $region21: #{pallas_diffusion_model_identity.1} parent=19 // loop_pre_header
        _
      $region22: #{pallas_diffusion_model_identity.1} parent=19 // loop_header
        %s32 = sphi 0, %s36
        %p33 = scmp.ge.s32.totalorder %s32, 1
        %s37 = sphi %s0, %s0
        %s38 = sphi %s1, %s1
      $region23: #{pallas_diffusion_model_identity.1} parent=19 // loop_header_branch
        %35 = sbr.rel (%p33) target = $region27
      $region24: #{pallas_diffusion_model_identity.1} parent=19 // loop_body
        %v39 = vld [vmem:[%s37] sm:$0xff]
        %40 = vst [vmem:[%s38] sm:$0xff] %v39
        %v41 = vld [vmem:[%s37 + $0x8] sm:$0xff]
        %42 = vst [vmem:[%s38 + $0x8] sm:$0xff] %v41
      $region25: #{pallas_diffusion_model_identity.1} parent=19 // loop_footer
        %s36 = sadd.s32 1, %s32
      $region26: #{pallas_diffusion_model_identity.1} parent=19 // loop_footer_branch
        %31 = sbr.rel target = $region22
      $region27: #{pallas_diffusion_model_identity.1} parent=19 // loop_exit
        _
    $region20: #{pallas_diffusion_model_identity.1} parent=4 // pred_fallthru
      _
    %p43 = pneg %p27
    // Predicated region
    $region28: #{pallas_diffusion_model_identity.1} parent=4 // pred_check
      _
    $region29: #{pallas_diffusion_model_identity.1} parent=4 // pred_check_branch
      %45 = sbr.rel (%p27) target = $region31
    $region30: #{pallas_diffusion_model_identity.1} parent=4 // pred_region
      %s46 = sand.u32 16, 7
    $region31: #{pallas_diffusion_model_identity.1} parent=4 // pred_fallthru
      _
  $region5: #{pallas_diffusion_model_identity.1} parent=0 // pred_fallthru
    _
  // Predicated region
  $region6: #{pallas_diffusion_model_identity.1} parent=0 // pred_check
    %p11 = pneg %p7
  $region7: #{pallas_diffusion_model_identity.1} parent=0 // pred_check_branch
    %13 = sbr.rel (%p11) target = $region9
  $region8: #{pallas_diffusion_model_identity.1} parent=0 // pred_region
    %s14 = sshll.u32 1, 16
    %s15 = ssub.s32 %s14, 1
    loop: start=0, step=1, limit=1
    $region10: #{pallas_diffusion_model_identity.1} parent=8 // loop_pre_header
      _
    $region11: #{pallas_diffusion_model_identity.1} parent=8 // loop_header
      %s17 = sphi 0, %s21
      %p18 = scmp.ge.s32.totalorder %s17, 1
      %s22 = sphi %s0, %s0
      %s23 = sphi %s1, %s1
    $region12: #{pallas_diffusion_model_identity.1} parent=8 // loop_header_branch
      %20 = sbr.rel (%p18) target = $region16
    $region13: #{pallas_diffusion_model_identity.1} parent=8 // loop_body
      %v24 = vld [vmem:[%s22] sm:%s15]
      %25 = vst [vmem:[%s23] sm:%s15] %v24
    $region14: #{pallas_diffusion_model_identity.1} parent=8 // loop_footer
      %s21 = sadd.s32 1, %s17
    $region15: #{pallas_diffusion_model_identity.1} parent=8 // loop_footer_branch
      %16 = sbr.rel target = $region11
    $region16: #{pallas_diffusion_model_identity.1} parent=8 // loop_exit
      _
  $region9: #{pallas_diffusion_model_identity.1} parent=0 // pred_fallthru
    _
  // Predicated region
  $region32: #{pallas_diffusion_model_identity.1} parent=0 // pred_check
    _
  $region33: #{pallas_diffusion_model_identity.1} parent=0 // pred_check_branch
    %49 = sbr.rel (0) target = $region35
  $region34: #{pallas_diffusion_model_identity.1} parent=0 // pred_region
    %50 = vsyncadd [#allocation2], 256
  $region35: #{pallas_diffusion_model_identity.1} parent=0 // pred_fallthru
    _
  %52 = dma.done [#allocation2], 256
  %53 = vsyncmov [#allocation2]
  %s54 = vpop.sfrf %53
  %p55 = scmp.eq.s32.totalorder %s54, 0
  %p56 = pneg %p55
  %58 = shalt.err (%p56)

</llo_original>
